<compile_context>
chip_gen: v7x
topology: tpu7x:2x2x1
jax: 0.10.0
libtpu: 0.0.40
codegen_flags: <defaults>
</compile_context>

<pallas_src>
import functools

import jax
import jax.numpy as jnp
from jax.experimental import pallas as pl
from jax.experimental.pallas import tpu as pltpu

LANES = 128   # lane width; hidden/output feature dims are zero-padded to this
EPS = 1e-5    # PyTorch BatchNorm1d default eps


def _bn_relu(h, gamma, beta, inv_b, eps=EPS):
    """BatchNorm1d (training mode) + ReLU.

    sum(h) and sum(h*h) are independent XLU reductions; var = E[h^2] - mean^2;
    affine folded into a single full-tile FMA: h*scale + shift.
    Padded lanes stay exactly 0 because gamma/beta are zero-padded.
    """
    s1 = jnp.sum(h, axis=0, keepdims=True)
    s2 = jnp.sum(h * h, axis=0, keepdims=True)
    mean = s1 * inv_b
    var = s2 * inv_b - mean * mean
    scale = gamma * jax.lax.rsqrt(var + eps)          # rsqrt -> EUP slot
    shift = beta - mean * scale
    return jnp.maximum(h * scale + shift, 0.0)


def dqn_kernel(state_ref, pslab_ref, wslab_ref, out_ref, *, input_dims, batch):
    # One vld for all ten tiny 1-D params, then slice the value.
    p = pslab_ref[...]                                        # (8, 128) f32
    g1, be1 = p[0:1, :], p[1:2, :]
    g2, be2 = p[2:3, :], p[3:4, :]
    g3, be3 = p[4:5, :], p[5:6, :]
    asp, asp_eps = p[6:7, :], p[7:8, :]                       # asp, 1e-4*asp

    x = state_ref[...]                                        # (B, input_dims) bf16

    r1 = input_dims
    w1 = wslab_ref[0:r1, :]                                   # (input_dims, 128) bf16
    w2 = wslab_ref[r1:r1 + LANES, :]                          # (128, 128) bf16
    w3 = wslab_ref[r1 + LANES:r1 + 2 * LANES, :]              # (128, 128) bf16

    inv_b = jnp.float32(1.0 / batch)

    # Linear biases omitted: exactly cancelled by training-mode BN mean-subtract.
    h1 = _bn_relu(jnp.dot(x, w1, preferred_element_type=jnp.float32),
                  g1, be1, inv_b)
    h2 = _bn_relu(jnp.dot(h1.astype(jnp.bfloat16), w2,
                          preferred_element_type=jnp.float32),
                  g2, be2, inv_b)
    h3 = _bn_relu(jnp.dot(h2.astype(jnp.bfloat16), w3,
                          preferred_element_type=jnp.float32),
                  g3, be3, inv_b)

    # actions = (h3 + 1e-4) * action_space  ==  h3*asp + (1e-4*asp)
    out_ref[...] = h3 * asp + asp_eps                         # lane-dense (B, 128) store


def init_params(key, input_dims, fc1_dims, fc2_dims, n_actions):
    """PyTorch-style init: Linear U(-1/sqrt(fan_in), ...), BN gamma=1, beta=0.
    Linear weights stored as (in, out)."""
    def linear(key, fan_in, fan_out):
        kw, kb = jax.random.split(key)
        bound = 1.0 / jnp.sqrt(fan_in)
        w = jax.random.uniform(kw, (fan_in, fan_out), jnp.float32, -bound, bound)
        b = jax.random.uniform(kb, (fan_out,), jnp.float32, -bound, bound)
        return w, b

    k1, k2, k3 = jax.random.split(key, 3)
    w1, b1 = linear(k1, input_dims, fc1_dims)
    w2, b2 = linear(k2, fc1_dims, fc2_dims)
    w3, b3 = linear(k3, fc2_dims, n_actions)
    return dict(
        w1=w1, b1=b1, g1=jnp.ones((fc1_dims,), jnp.float32), be1=jnp.zeros((fc1_dims,), jnp.float32),
        w2=w2, b2=b2, g2=jnp.ones((fc2_dims,), jnp.float32), be2=jnp.zeros((fc2_dims,), jnp.float32),
        w3=w3, b3=b3, g3=jnp.ones((n_actions,), jnp.float32), be3=jnp.zeros((n_actions,), jnp.float32),
    )


def pack_params(params, action_space, input_dims):
    """One-time packing (off the hot path):
       - all ten 1-D params into ONE (8, 128) f32 slab (zero-padded; the
         zero-padding of gamma/beta/asp is what keeps padded lanes exactly 0),
       - the three weights zero-padded to 128 lanes and stacked into ONE
         (input_dims + 256, 128) slab, stored in bfloat16 for native MXU +
         half the DMA on v6e/v7x."""
    fc1 = params["g1"].shape[0]
    fc2 = params["g2"].shape[0]
    n_act = params["g3"].shape[0]
    assert input_dims % 8 == 0, "input_dims must be sublane-aligned for the weight slab"
    assert fc1 <= LANES and fc2 <= LANES and n_act <= LANES, "dims must fit one 128-lane tile"

    def pad2d(a, rows, cols):
        return jnp.zeros((rows, cols), jnp.float32).at[:a.shape[0], :a.shape[1]].set(a)

    w1 = pad2d(params["w1"], input_dims, LANES)     # (input_dims, 128)
    w2 = pad2d(params["w2"], LANES, LANES)          # (128, 128), zeros outside real block
    w3 = pad2d(params["w3"], LANES, LANES)          # (128, 128)
    wslab = jnp.concatenate([w1, w2, w3], axis=0).astype(jnp.bfloat16)

    def row(v):
        return jnp.zeros((LANES,), jnp.float32).at[:v.shape[0]].set(v)

    asp = row(action_space.astype(jnp.float32))
    pslab = jnp.stack([
        row(params["g1"]), row(params["be1"]),
        row(params["g2"]), row(params["be2"]),
        row(params["g3"]), row(params["be3"]),
        asp, asp * 1e-4,                            # epilogue constant hoisted here
    ], axis=0)                                      # (8, 128) f32
    return pslab, wslab


@functools.partial(jax.jit, static_argnames=("input_dims", "n_actions"))
def dqn_forward(state, pslab, wslab, *, input_dims, n_actions):
    """state: (num_batches, B, input_dims) — each minibatch is one independent
    forward() of the PyTorch module (BN statistics are per-minibatch)."""
    NB, B, D = state.shape
    assert D == input_dims
    kernel = functools.partial(dqn_kernel, input_dims=input_dims, batch=B)

    out_padded = pl.pallas_call(
        kernel,
        out_shape=jax.ShapeDtypeStruct((NB, B, LANES), jnp.float32),
        grid=(NB,),
        in_specs=[
            # per-minibatch state block, squeezed leading axis
            pl.BlockSpec((None, B, input_dims), lambda i: (i, 0, 0)),
            # constant block index -> DMA'd once, VMEM-resident across the grid
            pl.BlockSpec((8, LANES), lambda i: (0, 0)),
            pl.BlockSpec((input_dims + 2 * LANES, LANES), lambda i: (0, 0)),
        ],
        out_specs=pl.BlockSpec((None, B, LANES), lambda i: (i, 0, 0)),
        compiler_params=pltpu.CompilerParams(
            dimension_semantics=("parallel",),       # v7x: split grid across 2 TCs
            vmem_limit_bytes=32 * 1024 * 1024,       # explicit; v7x has 64 MiB physical
        ),
    )(state.astype(jnp.bfloat16), pslab, wslab)

    return out_padded[..., :n_actions]


def dqn_reference(state, action_space, params, eps=EPS):
    """Pure-JAX f32 reference matching the PyTorch forward per minibatch
    (BN in train mode, linear biases kept)."""
    def one(mb):
        def bn_relu(x, g, b):
            m = x.mean(axis=0, keepdims=True)
            v = ((x - m) ** 2).mean(axis=0, keepdims=True)
            return jnp.maximum((x - m) / jnp.sqrt(v + eps) * g + b, 0.0)
        x = bn_relu(mb @ params["w1"] + params["b1"], params["g1"], params["be1"])
        x = bn_relu(x @ params["w2"] + params["b2"], params["g2"], params["be2"])
        x = bn_relu(x @ params["w3"] + params["b3"], params["g3"], params["be3"])
        return (x + 0.0001) * action_space[None, :]
    return jax.vmap(one)(state)


if __name__ == "__main__":
    # Small shapes consistent with the module; 4 independent minibatches of 8.
    NUM_BATCHES, B, INPUT_DIMS, FC1, FC2, N_ACTIONS = 4, 8, 16, 32, 32, 8

    key = jax.random.PRNGKey(0)
    k_params, k_state, k_asp = jax.random.split(key, 3)

    params = init_params(k_params, INPUT_DIMS, FC1, FC2, N_ACTIONS)
    state = jax.random.normal(k_state, (NUM_BATCHES, B, INPUT_DIMS), jnp.float32)
    # action_space: availability mask over actions (broadcasts against (B, n_actions))
    action_space = jax.random.bernoulli(k_asp, 0.7, (N_ACTIONS,)).astype(jnp.float32)

    pslab, wslab = pack_params(params, action_space, INPUT_DIMS)
    pslab, wslab = jax.block_until_ready((pslab, wslab))

    out = dqn_forward(state, pslab, wslab, input_dims=INPUT_DIMS, n_actions=N_ACTIONS)
    out = jax.block_until_ready(out)

    ref = dqn_reference(state, action_space, params)
    assert out.shape == (NUM_BATCHES, B, N_ACTIONS)
    # Tolerance loosened vs. the f32 reference because matmul inputs are bf16.
    assert jnp.allclose(out, ref, atol=5e-2, rtol=5e-2), (out, ref)

    print("KERNEL_OK")
</pallas_src>

<mosaic_0001>
module attributes {stable_mosaic.version = 11 : i64} {
  func.func @dqn_kernel(%arg0: i32, %arg1: memref<1x8x16xbf16, #tpu.memory_space<vmem>>, %arg2: memref<8x128xf32, #tpu.memory_space<vmem>>, %arg3: memref<272x128xbf16, #tpu.memory_space<vmem>>, %arg4: memref<1x8x128xf32, #tpu.memory_space<vmem>>) attributes {dimension_semantics = [#tpu.dimension_semantics<parallel>], iteration_bounds = array<i64: 4>, scalar_prefetch = 0 : i64, scratch_operands = 0 : i64, tpu.core_type = #tpu.core_type<tc>, window_params = [{transform_indices = @transform_0, window_bounds = array<i64: 1, 8, 16>}, {pipeline_mode = #tpu.pipeline_mode<synchronous>, transform_indices = @transform_1, window_bounds = array<i64: 8, 128>}, {pipeline_mode = #tpu.pipeline_mode<synchronous>, transform_indices = @transform_2, window_bounds = array<i64: 272, 128>}, {transform_indices = @transform_3, window_bounds = array<i64: 1, 8, 128>}]} {
    %c0 = arith.constant 0 : index
    %c0_0 = arith.constant 0 : index
    %0 = vector.load %arg2[%c0, %c0_0] : memref<8x128xf32, #tpu.memory_space<vmem>>, vector<8x128xf32>
    %1 = vector.extract_strided_slice %0 {offsets = [0, 0], sizes = [1, 128], strides = [1, 1]} : vector<8x128xf32> to vector<1x128xf32>
    %2 = vector.extract_strided_slice %0 {offsets = [1, 0], sizes = [1, 128], strides = [1, 1]} : vector<8x128xf32> to vector<1x128xf32>
    %3 = vector.extract_strided_slice %0 {offsets = [2, 0], sizes = [1, 128], strides = [1, 1]} : vector<8x128xf32> to vector<1x128xf32>
    %4 = vector.extract_strided_slice %0 {offsets = [3, 0], sizes = [1, 128], strides = [1, 1]} : vector<8x128xf32> to vector<1x128xf32>
    %5 = vector.extract_strided_slice %0 {offsets = [4, 0], sizes = [1, 128], strides = [1, 1]} : vector<8x128xf32> to vector<1x128xf32>
    %6 = vector.extract_strided_slice %0 {offsets = [5, 0], sizes = [1, 128], strides = [1, 1]} : vector<8x128xf32> to vector<1x128xf32>
    %7 = vector.extract_strided_slice %0 {offsets = [6, 0], sizes = [1, 128], strides = [1, 1]} : vector<8x128xf32> to vector<1x128xf32>
    %8 = vector.extract_strided_slice %0 {offsets = [7, 0], sizes = [1, 128], strides = [1, 1]} : vector<8x128xf32> to vector<1x128xf32>
    %c0_1 = arith.constant 0 : index
    %c0_2 = arith.constant 0 : index
    %c0_3 = arith.constant 0 : index
    %9 = vector.load %arg1[%c0_1, %c0_2, %c0_3] : memref<1x8x16xbf16, #tpu.memory_space<vmem>>, vector<1x8x16xbf16>
    %10 = vector.shape_cast %9 : vector<1x8x16xbf16> to vector<8x16xbf16>
    %c0_4 = arith.constant 0 : index
    %c0_5 = arith.constant 0 : index
    %11 = vector.load %arg3[%c0_4, %c0_5] : memref<272x128xbf16, #tpu.memory_space<vmem>>, vector<16x128xbf16>
    %c16 = arith.constant 16 : index
    %c0_6 = arith.constant 0 : index
    %12 = vector.load %arg3[%c16, %c0_6] : memref<272x128xbf16, #tpu.memory_space<vmem>>, vector<128x128xbf16>
    %c144 = arith.constant 144 : index
    %c0_7 = arith.constant 0 : index
    %13 = vector.load %arg3[%c144, %c0_7] : memref<272x128xbf16, #tpu.memory_space<vmem>>, vector<128x128xbf16>
    %cst = arith.constant dense<0.000000e+00> : vector<8x128xf32>
    %14 = tpu.matmul %10, %11, %cst {dimension_numbers = #tpu.dot_dimension_numbers<[1], [0], [0], [1], [0, 0, 1, 1], [], []>} : vector<8x16xbf16>, vector<16x128xbf16>, vector<8x128xf32> -> vector<8x128xf32>
    %cst_8 = arith.constant dense<0.000000e+00> : vector<128xf32>
    %15 = vector.multi_reduction <add>, %14, %cst_8 [0] : vector<8x128xf32> to vector<128xf32>
    %16 = vector.shape_cast %15 : vector<128xf32> to vector<1x128xf32>
    %17 = arith.mulf %14, %14 : vector<8x128xf32>
    %cst_9 = arith.constant dense<0.000000e+00> : vector<128xf32>
    %18 = vector.multi_reduction <add>, %17, %cst_9 [0] : vector<8x128xf32> to vector<128xf32>
    %19 = vector.shape_cast %18 : vector<128xf32> to vector<1x128xf32>
    %cst_10 = arith.constant 1.250000e-01 : f32
    %20 = vector.broadcast %cst_10 : f32 to vector<1x128xf32>
    %21 = arith.mulf %16, %20 : vector<1x128xf32>
    %cst_11 = arith.constant 1.250000e-01 : f32
    %22 = vector.broadcast %cst_11 : f32 to vector<1x128xf32>
    %23 = arith.mulf %19, %22 : vector<1x128xf32>
    %24 = arith.mulf %21, %21 : vector<1x128xf32>
    %25 = arith.subf %23, %24 : vector<1x128xf32>
    %cst_12 = arith.constant 9.99999974E-6 : f32
    %26 = vector.broadcast %cst_12 : f32 to vector<1x128xf32>
    %27 = arith.addf %25, %26 : vector<1x128xf32>
    %28 = math.rsqrt %27 : vector<1x128xf32>
    %29 = arith.mulf %1, %28 : vector<1x128xf32>
    %30 = arith.mulf %21, %29 : vector<1x128xf32>
    %31 = arith.subf %2, %30 : vector<1x128xf32>
    %32 = vector.broadcast %29 : vector<1x128xf32> to vector<8x128xf32>
    %33 = arith.mulf %14, %32 : vector<8x128xf32>
    %34 = vector.broadcast %31 : vector<1x128xf32> to vector<8x128xf32>
    %35 = arith.addf %33, %34 : vector<8x128xf32>
    %cst_13 = arith.constant 0.000000e+00 : f32
    %36 = vector.broadcast %cst_13 : f32 to vector<8x128xf32>
    %37 = arith.maximumf %35, %36 : vector<8x128xf32>
    %38 = arith.truncf %37 : vector<8x128xf32> to vector<8x128xbf16>
    %cst_14 = arith.constant dense<0.000000e+00> : vector<8x128xf32>
    %39 = tpu.matmul %38, %12, %cst_14 {dimension_numbers = #tpu.dot_dimension_numbers<[1], [0], [0], [1], [0, 0, 1, 1], [], []>} : vector<8x128xbf16>, vector<128x128xbf16>, vector<8x128xf32> -> vector<8x128xf32>
    %cst_15 = arith.constant dense<0.000000e+00> : vector<128xf32>
    %40 = vector.multi_reduction <add>, %39, %cst_15 [0] : vector<8x128xf32> to vector<128xf32>
    %41 = vector.shape_cast %40 : vector<128xf32> to vector<1x128xf32>
    %42 = arith.mulf %39, %39 : vector<8x128xf32>
    %cst_16 = arith.constant dense<0.000000e+00> : vector<128xf32>
    %43 = vector.multi_reduction <add>, %42, %cst_16 [0] : vector<8x128xf32> to vector<128xf32>
    %44 = vector.shape_cast %43 : vector<128xf32> to vector<1x128xf32>
    %cst_17 = arith.constant 1.250000e-01 : f32
    %45 = vector.broadcast %cst_17 : f32 to vector<1x128xf32>
    %46 = arith.mulf %41, %45 : vector<1x128xf32>
    %cst_18 = arith.constant 1.250000e-01 : f32
    %47 = vector.broadcast %cst_18 : f32 to vector<1x128xf32>
    %48 = arith.mulf %44, %47 : vector<1x128xf32>
    %49 = arith.mulf %46, %46 : vector<1x128xf32>
    %50 = arith.subf %48, %49 : vector<1x128xf32>
    %cst_19 = arith.constant 9.99999974E-6 : f32
    %51 = vector.broadcast %cst_19 : f32 to vector<1x128xf32>
    %52 = arith.addf %50, %51 : vector<1x128xf32>
    %53 = math.rsqrt %52 : vector<1x128xf32>
    %54 = arith.mulf %3, %53 : vector<1x128xf32>
    %55 = arith.mulf %46, %54 : vector<1x128xf32>
    %56 = arith.subf %4, %55 : vector<1x128xf32>
    %57 = vector.broadcast %54 : vector<1x128xf32> to vector<8x128xf32>
    %58 = arith.mulf %39, %57 : vector<8x128xf32>
    %59 = vector.broadcast %56 : vector<1x128xf32> to vector<8x128xf32>
    %60 = arith.addf %58, %59 : vector<8x128xf32>
    %cst_20 = arith.constant 0.000000e+00 : f32
    %61 = vector.broadcast %cst_20 : f32 to vector<8x128xf32>
    %62 = arith.maximumf %60, %61 : vector<8x128xf32>
    %63 = arith.truncf %62 : vector<8x128xf32> to vector<8x128xbf16>
    %cst_21 = arith.constant dense<0.000000e+00> : vector<8x128xf32>
    %64 = tpu.matmul %63, %13, %cst_21 {dimension_numbers = #tpu.dot_dimension_numbers<[1], [0], [0], [1], [0, 0, 1, 1], [], []>} : vector<8x128xbf16>, vector<128x128xbf16>, vector<8x128xf32> -> vector<8x128xf32>
    %cst_22 = arith.constant dense<0.000000e+00> : vector<128xf32>
    %65 = vector.multi_reduction <add>, %64, %cst_22 [0] : vector<8x128xf32> to vector<128xf32>
    %66 = vector.shape_cast %65 : vector<128xf32> to vector<1x128xf32>
    %67 = arith.mulf %64, %64 : vector<8x128xf32>
    %cst_23 = arith.constant dense<0.000000e+00> : vector<128xf32>
    %68 = vector.multi_reduction <add>, %67, %cst_23 [0] : vector<8x128xf32> to vector<128xf32>
    %69 = vector.shape_cast %68 : vector<128xf32> to vector<1x128xf32>
    %cst_24 = arith.constant 1.250000e-01 : f32
    %70 = vector.broadcast %cst_24 : f32 to vector<1x128xf32>
    %71 = arith.mulf %66, %70 : vector<1x128xf32>
    %cst_25 = arith.constant 1.250000e-01 : f32
    %72 = vector.broadcast %cst_25 : f32 to vector<1x128xf32>
    %73 = arith.mulf %69, %72 : vector<1x128xf32>
    %74 = arith.mulf %71, %71 : vector<1x128xf32>
    %75 = arith.subf %73, %74 : vector<1x128xf32>
    %cst_26 = arith.constant 9.99999974E-6 : f32
    %76 = vector.broadcast %cst_26 : f32 to vector<1x128xf32>
    %77 = arith.addf %75, %76 : vector<1x128xf32>
    %78 = math.rsqrt %77 : vector<1x128xf32>
    %79 = arith.mulf %5, %78 : vector<1x128xf32>
    %80 = arith.mulf %71, %79 : vector<1x128xf32>
    %81 = arith.subf %6, %80 : vector<1x128xf32>
    %82 = vector.broadcast %79 : vector<1x128xf32> to vector<8x128xf32>
    %83 = arith.mulf %64, %82 : vector<8x128xf32>
    %84 = vector.broadcast %81 : vector<1x128xf32> to vector<8x128xf32>
    %85 = arith.addf %83, %84 : vector<8x128xf32>
    %cst_27 = arith.constant 0.000000e+00 : f32
    %86 = vector.broadcast %cst_27 : f32 to vector<8x128xf32>
    %87 = arith.maximumf %85, %86 : vector<8x128xf32>
    %88 = vector.broadcast %7 : vector<1x128xf32> to vector<8x128xf32>
    %89 = arith.mulf %87, %88 : vector<8x128xf32>
    %90 = vector.broadcast %8 : vector<1x128xf32> to vector<8x128xf32>
    %91 = arith.addf %89, %90 : vector<8x128xf32>
    %c0_28 = arith.constant 0 : index
    %c0_29 = arith.constant 0 : index
    %c0_30 = arith.constant 0 : index
    %92 = vector.load %arg4[%c0_28, %c0_29, %c0_30] : memref<1x8x128xf32, #tpu.memory_space<vmem>>, vector<1x8x128xf32>
    %93 = vector.shape_cast %92 : vector<1x8x128xf32> to vector<8x128xf32>
    %94 = vector.shape_cast %91 : vector<8x128xf32> to vector<1x8x128xf32>
    tpu.vector_store %arg4[%c0_28, %c0_29, %c0_30], %94 {strides = array<i32>} : memref<1x8x128xf32, #tpu.memory_space<vmem>>, vector<1x8x128xf32>,
    return
  }
  func.func @transform_0(%arg0: i32) -> (i32, i32, i32) {
    %c0_i32 = arith.constant 0 : i32
    %c0_i32_0 = arith.constant 0 : i32
    %c0_i32_1 = arith.constant 0 : i32
    return %arg0, %c0_i32, %c0_i32_0 : i32, i32, i32
  }
  func.func @transform_1(%arg0: i32) -> (i32, i32) {
    %c0_i32 = arith.constant 0 : i32
    %c0_i32_0 = arith.constant 0 : i32
    %c0_i32_1 = arith.constant 0 : i32
    return %c0_i32, %c0_i32_0 : i32, i32
  }
  func.func @transform_2(%arg0: i32) -> (i32, i32) {
    %c0_i32 = arith.constant 0 : i32
    %c0_i32_0 = arith.constant 0 : i32
    %c0_i32_1 = arith.constant 0 : i32
    return %c0_i32, %c0_i32_0 : i32, i32
  }
  func.func @transform_3(%arg0: i32) -> (i32, i32, i32) {
    %c0_i32 = arith.constant 0 : i32
    %c0_i32_0 = arith.constant 0 : i32
    %c0_i32_1 = arith.constant 0 : i32
    return %arg0, %c0_i32, %c0_i32_0 : i32, i32, i32
  }
}

</mosaic_0001>

<llo_original>
// kernel: dqn_forward.1
$region0: #{dqn_forward.1}
  #allocation0 [shape = 'u32[]', space=smem, size = 0x4, offset = 0x4, fixed_abs, tag = 'smem constant byte address 0x4 - core index']
  #allocation1 [shape = 'u32[144,128]{1,0:T(1,128)}', space=vmem, size = 0x12000, scoped, tag = 'internal scratch']
  %s0 = inlined_call_operand.vmem [shape: bf16[4,8,16], index: 0, kind: input, shape index: {}]
  %s1 = inlined_call_operand.vmem [shape: f32[8,128], index: 1, kind: input, shape index: {}]
  %s2 = inlined_call_operand.hbm [shape: bf16[272,128], index: 2, kind: input, shape index: {}]
  %s3 = inlined_call_operand.hbm [shape: f32[4,8,128], index: 3, kind: output, shape index: {}]
  %s4 = sld [smem:[#allocation0]]
  $region49: #{dqn_forward.1} parent=0
    _
  %s6 = ssub.s32 1, %s4
  %s7 = scalar_select 0, %s6, %s4
  $region1: #{dqn_forward.1} parent=0
    #allocation2 [shape = 'u8[69632]{0}', space=vmem, size = 0x11000, scoped, tag = 'input window, operand 2, single buffered']
    #allocation3 [shape = 's32[2]{0}', space=sflag, size = 0x8, scoped, tag = 'scoped memory for dqn_forward.1']
    #allocation4 [shape = 's32[2]{0}', space=sflag, size = 0x8, scoped, tag = 'scoped memory for dqn_forward.1']
    #allocation5 [shape = 'u8[8192]{0}', space=vmem, size = 0x2000, scoped, tag = 'output window, operand 0']
    %8 = vsyncpa [#allocation3], 0
    %9 = vsyncpa [#allocation4], 0
    %s10 = scalar_lea.sflag [#allocation4], 1
    %11 = vsyncpa %s10, 0
    loop: start=0, step=1, limit=6
    $region2: #{dqn_forward.1} parent=1 // loop_pre_header
      _
    $region3: #{dqn_forward.1} parent=1 // loop_header
      %s13 = sphi 0, %s17
      %p14 = scmp.ge.s32.totalorder %s13, 6
      %s23 = sphi 0, %s25
      %s26 = sphi 0, %s23
      %s27 = sphi 0, %s26
      %s43 = sphi 0, %s27
      %s47 = sphi 0, %s47
      %s49 = sphi 0, %s47
      %s50 = sphi 0, %s49
      %s64 = sphi 0, %s50
      %s68 = sphi 0, %s68
      %s70 = sphi 0, %s68
      %s71 = sphi 0, %s70
      %s85 = sphi 0, %s71
      %s91 = sphi 0, %s93
      %s94 = sphi 0, %s91
      %s95 = sphi 0, %s94
      %s111 = sphi 0, %s95
    $region4: #{dqn_forward.1} parent=1 // loop_header_branch
      %16 = sbr.rel (%p14) target = $region8
    $region5: #{dqn_forward.1} parent=1 // loop_body
      %s18 = ssub.s32 %s13, 1
      %s19 = ssub.s32 %s13, 2
      %s20 = sadd.s32 %s13, 1
      %s21 = ssub.s32 %s13, %s20
      %p22 = scmp.eq.s32.totalorder %s21, 0
      %s24 = sadd.s32 %s23, 1
      %s25 = scalar_select %p22, %s23, %s24
      %p28 = pneg %p22
      %p29 = scmp.eq.s32.totalorder %s13, 3
      %p30 = por %p28, %p29
      %p31 = scmp.ne.s32.totalorder %s23, %s26
      %p32 = scmp.eq.s32.totalorder %s13, 0
      %p33 = por %p31, %p32
      %p34 = scmp.ne.s32.totalorder %s23, %s26
      %p35 = scmp.eq.s32.totalorder %s18, 3
      %p36 = por %p34, %p35
      %p37 = scmp.ne.s32.totalorder %s26, %s27
      %p38 = scmp.eq.s32.totalorder %s18, 0
      %p39 = por %p37, %p38
      %p40 = scmp.ne.s32.totalorder %s26, %s27
      %p41 = scmp.eq.s32.totalorder %s19, 3
      %p42 = por %p40, %p41
      %p44 = scmp.ne.s32.totalorder %s27, %s43
      %p45 = scmp.eq.s32.totalorder %s19, 0
      %p46 = por %p44, %p45
      %s48 = sadd.s32 %s47, 1
      %p51 = scmp.eq.s32.totalorder %s13, 3
      %p52 = scmp.ne.s32.totalorder %s47, %s49
      %p53 = scmp.eq.s32.totalorder %s13, 0
      %p54 = por %p52, %p53
      %p55 = scmp.ne.s32.totalorder %s47, %s49
      %p56 = scmp.eq.s32.totalorder %s18, 3
      %p57 = por %p55, %p56
      %p58 = scmp.ne.s32.totalorder %s49, %s50
      %p59 = scmp.eq.s32.totalorder %s18, 0
      %p60 = por %p58, %p59
      %p61 = scmp.ne.s32.totalorder %s49, %s50
      %p62 = scmp.eq.s32.totalorder %s19, 3
      %p63 = por %p61, %p62
      %p65 = scmp.ne.s32.totalorder %s50, %s64
      %p66 = scmp.eq.s32.totalorder %s19, 0
      %p67 = por %p65, %p66
      %s69 = sadd.s32 %s68, 1
      %p72 = scmp.eq.s32.totalorder %s13, 3
      %p73 = scmp.ne.s32.totalorder %s68, %s70
      %p74 = scmp.eq.s32.totalorder %s13, 0
      %p75 = por %p73, %p74
      %p76 = scmp.ne.s32.totalorder %s68, %s70
      %p77 = scmp.eq.s32.totalorder %s18, 3
      %p78 = por %p76, %p77
      %p79 = scmp.ne.s32.totalorder %s70, %s71
      %p80 = scmp.eq.s32.totalorder %s18, 0
      %p81 = por %p79, %p80
      %p82 = scmp.ne.s32.totalorder %s70, %s71
      %p83 = scmp.eq.s32.totalorder %s19, 3
      %p84 = por %p82, %p83
      %p86 = scmp.ne.s32.totalorder %s71, %s85
      %p87 = scmp.eq.s32.totalorder %s19, 0
      %p88 = por %p86, %p87
      %s89 = ssub.s32 %s13, %s20
      %p90 = scmp.eq.s32.totalorder %s89, 0
      %s92 = sadd.s32 %s91, 1
      %s93 = scalar_select %p90, %s91, %s92
      %p96 = pneg %p90
      %p97 = scmp.eq.s32.totalorder %s13, 3
      %p98 = por %p96, %p97
      %p99 = scmp.ne.s32.totalorder %s91, %s94
      %p100 = scmp.eq.s32.totalorder %s13, 0
      %p101 = por %p99, %p100
      %p102 = scmp.ne.s32.totalorder %s91, %s94
      %p103 = scmp.eq.s32.totalorder %s18, 3
      %p104 = por %p102, %p103
      %p105 = scmp.ne.s32.totalorder %s94, %s95
      %p106 = scmp.eq.s32.totalorder %s18, 0
      %p107 = por %p105, %p106
      %p108 = scmp.ne.s32.totalorder %s94, %s95
      %p109 = scmp.eq.s32.totalorder %s19, 3
      %p110 = por %p108, %p109
      %p112 = scmp.ne.s32.totalorder %s95, %s111
      %p113 = scmp.eq.s32.totalorder %s19, 0
      %p114 = por %p112, %p113
      %p115 = scmp.le.s32.totalorder 1, %s13
      %p116 = scmp.lt.s32.totalorder %s13, 5
      %p117 = pnand %p115, %p116
      %p118 = pneg %p117
      // Predicated region
      $region9: #{dqn_forward.1} parent=5 // pred_check
        _
      $region10: #{dqn_forward.1} parent=5 // pred_check_branch
        %120 = sbr.rel (%p117) target = $region12
      $region11: #{dqn_forward.1} parent=5 // pred_region
        %s121 = ssub.s32 %s13, 1
        // Predicated region
        $region13: #{dqn_forward.1} parent=11 // pred_check
          %p122 = pneg %p60
        $region14: #{dqn_forward.1} parent=11 // pred_check_branch
          %124 = sbr.rel (%p122) target = $region16
        $region15: #{dqn_forward.1} parent=11 // pred_region
          _
        $region16: #{dqn_forward.1} parent=11 // pred_fallthru
          _
        // Predicated region
        $region17: #{dqn_forward.1} parent=11 // pred_check
          %p125 = pneg %p81
        $region18: #{dqn_forward.1} parent=11 // pred_check_branch
          %127 = sbr.rel (%p125) target = $region20
        $region19: #{dqn_forward.1} parent=11 // pred_region
          %s129 = ssub.s32 2176, 2176
          %130 = vsyncadd [#allocation3], %s129
          %s131 = sshll.u32 [#allocation2], 4
          %s132 = int_to_ptr.vmem [resolvable:$true] %s131
          %137 = dma.hbm_to_vmem [thread:$0]  %s2, 2176, %s132, [#allocation3], 64, 64, 4
        $region20: #{dqn_forward.1} parent=11 // pred_fallthru
          _
      $region12: #{dqn_forward.1} parent=5 // pred_fallthru
        _
      %p138 = scmp.lt.s32.totalorder %s13, 4
      // Predicated region
      $region21: #{dqn_forward.1} parent=5 // pred_check
        %p139 = pneg %p138
      $region22: #{dqn_forward.1} parent=5 // pred_check_branch
        %141 = sbr.rel (%p139) target = $region24
      $region23: #{dqn_forward.1} parent=5 // pred_region
        // Predicated region
        $region25: #{dqn_forward.1} parent=23 // pred_check
          %p142 = pneg %p33
        $region26: #{dqn_forward.1} parent=23 // pred_check_branch
          %144 = sbr.rel (%p142) target = $region28
        $region27: #{dqn_forward.1} parent=23 // pred_region
          %p145 = scmp.lt.s32.totalorder %s13, 3
          %s146 = scalar_select %p145, %s13, 3
          %s147 = smul.addr %s146, 4
          %s148 = scalar_lea.vmem %s0, %s147
        $region28: #{dqn_forward.1} parent=23 // pred_fallthru
          _
      $region24: #{dqn_forward.1} parent=5 // pred_fallthru
        _
      %p149 = scmp.le.s32.totalorder 1, %s13
      %p150 = scmp.lt.s32.totalorder %s13, 5
      %p151 = pnand %p149, %p150
      %p152 = pneg %p151
      // Predicated region
      $region29: #{dqn_forward.1} parent=5 // pred_check
        _
      $region30: #{dqn_forward.1} parent=5 // pred_check_branch
        %154 = sbr.rel (%p151) target = $region32
      $region31: #{dqn_forward.1} parent=5 // pred_region
        %s155 = ssub.s32 %s13, 1
        // Predicated region
        $region33: #{dqn_forward.1} parent=31 // pred_check
          %p156 = pneg %p81
        $region34: #{dqn_forward.1} parent=31 // pred_check_branch
          %158 = sbr.rel (%p156) target = $region36
        $region35: #{dqn_forward.1} parent=31 // pred_region
          %159 = dma.done [#allocation3], 2176
        $region36: #{dqn_forward.1} parent=31 // pred_fallthru
          _
        %p160 = scmp.lt.s32.totalorder %s18, 3
        %s161 = scalar_select %p160, %s18, 3
        %s162 = smul.addr %s161, 4
        %s163 = scalar_lea.vmem %s0, %s162
        %p164 = pneg %p39
        %p165 = pneg %p36
        %p166 = pneg %p60
        %p167 = pneg %p57
        %p168 = pneg %p81
        %p169 = pneg %p78
        %p170 = pneg %p107
        %p171 = pneg %p104
        %s172 = sand.u32 %s94, 1
        %s173 = scalar_lea.sflag [#allocation4], %s172
        %s174 = sand.u32 %s94, 1
        %s175 = smul.addr %s174, 8
        %s176 = scalar_lea.vmem [#allocation5], %s175
        %p177 = scmp.lt.s32.totalorder %s18, 3
        %s178 = scalar_select %p177, %s18, 3
        %s179 = smul.addr %s178, 4
        %s180 = scalar_lea.vmem %s0, %s179
        %v182 = vld [vmem:[%s1] sm:$0xff]
        %v183 = vld [vmem:[%s180] sm:$0xf]
        %v184 = vld [vmem:[#allocation2] sm:$0xf]
        %v185 = vld [vmem:[#allocation2 + $0x4] sm:$0xf]
        %v186 = vld [vmem:[#allocation2 + $0x8] sm:$0xf]
        %v187 = vld [vmem:[#allocation2 + $0xc] sm:$0xf]
        %v188 = vld [vmem:[#allocation2 + $0x10] sm:$0xf]
        %v189 = vld [vmem:[#allocation2 + $0x14] sm:$0xf]
        %v190 = vld [vmem:[#allocation2 + $0x18] sm:$0xf]
        %v191 = vld [vmem:[#allocation2 + $0x1c] sm:$0xf]
        %v192 = vld [vmem:[#allocation2 + $0x20] sm:$0xf]
        %v193 = vld [vmem:[#allocation2 + $0x24] sm:$0xf]
        %v194 = vld [vmem:[#allocation2 + $0x28] sm:$0xf]
        %v195 = vld [vmem:[#allocation2 + $0x2c] sm:$0xf]
        %v196 = vld [vmem:[#allocation2 + $0x30] sm:$0xf]
        %v197 = vld [vmem:[#allocation2 + $0x34] sm:$0xf]
        %v198 = vld [vmem:[#allocation2 + $0x38] sm:$0xf]
        %v199 = vld [vmem:[#allocation2 + $0x3c] sm:$0xf]
        %v200 = vld [vmem:[#allocation2 + $0x40] sm:$0xf]
        %v201 = vld [vmem:[#allocation2 + $0x44] sm:$0xf]
        %v202 = vld [vmem:[#allocation2 + $0x48] sm:$0xf]
        %v203 = vld [vmem:[#allocation2 + $0x4c] sm:$0xf]
        %v204 = vld [vmem:[#allocation2 + $0x50] sm:$0xf]
        %v205 = vld [vmem:[#allocation2 + $0x54] sm:$0xf]
        %v206 = vld [vmem:[#allocation2 + $0x58] sm:$0xf]
        %v207 = vld [vmem:[#allocation2 + $0x5c] sm:$0xf]
        %v208 = vld [vmem:[#allocation2 + $0x60] sm:$0xf]
        %v209 = vld [vmem:[#allocation2 + $0x64] sm:$0xf]
        %v210 = vld [vmem:[#allocation2 + $0x68] sm:$0xf]
        %v211 = vld [vmem:[#allocation2 + $0x6c] sm:$0xf]
        %v212 = vld [vmem:[#allocation2 + $0x70] sm:$0xf]
        %v213 = vld [vmem:[#allocation2 + $0x74] sm:$0xf]
        %v214 = vld [vmem:[#allocation2 + $0x78] sm:$0xf]
        %v215 = vld [vmem:[#allocation2 + $0x7c] sm:$0xf]
        %v216 = vld [vmem:[#allocation2 + $0x80] sm:$0xf]
        %v217 = vld [vmem:[#allocation2 + $0x84] sm:$0xf]
        %v220 = vunpack.c.l.b16 %v184
        %v221 = vunpack.c.l.b16 %v185
        %v222 = vpack.c.b16 %v221, %v220
        %vm224 = vcmask 130048
        %v226 = vsel %vm224, %v183, 0
        %228 = vmatprep.subr.bf16.mxu0 0
        %229 = vmatpush1.bf16.msra.mxu0 %v222
        %230 = vmatprep.subr.bf16.mxu0 0
        %231 = vmatpush1.bf16.msra.mxu0 0
        %232 = vmatprep.subr.bf16.mxu0 0
        %233 = vmatpush1.bf16.msra.mxu0 0
        %234 = vmatprep.subr.bf16.mxu0 0
        %235 = vmatpush1.bf16.msra.mxu0 0
        %236 = vmatprep.subr.bf16.mxu0 0
        %237 = vmatpush1.bf16.msra.mxu0 0
        %238 = vmatprep.subr.bf16.mxu0 0
        %239 = vmatpush1.bf16.msra.mxu0 0
        %240 = vmatprep.subr.bf16.mxu0 0
        %241 = vmatpush1.bf16.msra.mxu0 0
        %242 = vmatprep.subr.bf16.mxu0 0
        %243 = vmatpush1.bf16.msra.mxu0 0
        %244 = vmatprep.subr.bf16.mxu0 0
        %245 = vmatpush1.bf16.msra.mxu0 0
        %246 = vmatprep.subr.bf16.mxu0 0
        %247 = vmatpush1.bf16.msra.mxu0 0
        %248 = vmatprep.subr.bf16.mxu0 0
        %249 = vmatpush1.bf16.msra.mxu0 0
        %250 = vmatprep.subr.bf16.mxu0 0
        %251 = vmatpush1.bf16.msra.mxu0 0
        %252 = vmatprep.subr.bf16.mxu0 0
        %253 = vmatpush1.bf16.msra.mxu0 0
        %254 = vmatprep.subr.bf16.mxu0 0
        %255 = vmatpush1.bf16.msra.mxu0 0
        %256 = vmatprep.subr.bf16.mxu0 0
        %257 = vmatpush1.bf16.msra.mxu0 0
        %258 = vmatprep.subr.bf16.mxu0 0
        %259 = vmatpush1.bf16.msra.mxu0 0
        %260 = vmatprep.mubr.bf16.mxu0 0
        %261 = vmatmul.mubr.bf16.gmra.mrb[0].mxu0 %v226
        %v262 = vpop.f32.mrb[0].mxu0
        %v263 = vadd.f32 0.0, %v262
        %v264 = vpop.f32.mrb[0].mxu0
        %v265 = vpop.f32.mrb[0].mxu0
        %v266 = vpop.f32.mrb[0].mxu0
        %267 = vdwg.mxu0
        %v268 = vrot.slane %v263, 4
        %v269 = vadd.f32 %v263, %v268
        %v270 = vrot.slane %v269, 2
        %v271 = vadd.f32 %v269, %v270
        %v272 = vrot.slane %v271, 1
        %v273 = vadd.f32 %v271, %v272
        %v274 = vmul.f32 %v263, %v263
        %v275 = vrot.slane %v274, 4
        %v276 = vadd.f32 %v274, %v275
        %v277 = vrot.slane %v276, 2
        %v278 = vadd.f32 %v276, %v277
        %v279 = vrot.slane %v278, 1
        %v280 = vadd.f32 %v278, %v279
        %v281 = vmul.f32 %v273, 0.125
        %v282 = vmul.f32 %v280, 0.125
        %v283 = vmul.f32 %v281, %v281
        %v284 = vsub.f32 %v282, %v283
        %v285 = vadd.f32 %v284, 1e-05
        %v286 = vrsqrt.pop %v285
        %v287 = vmul.f32 %v182, %v286
        %v288 = vmul.f32 %v281, %v287
        %v290 = vrot.slane %v288, 7
        %v292 = vsub.f32 %v182, %v290
        %v293 = vlaneseq
        %v294 = vshrl.u32 %v293, 7
        %v295 = vsub.s32 0, %v294
        %v296 = vrot.slane %v287, %v295
        %v297 = vmul.f32 %v263, %v296
        %v298 = vlaneseq
        %v299 = vshrl.u32 %v298, 7
        %v300 = vsub.s32 1, %v299
        %v301 = vrot.slane %v292, %v300
        %v302 = vadd.f32 %v297, %v301
        %v303 = vmax.f32 %v302, 0.0
        %v304 = vpack.c.bf16 %v303, %v303
        %v321 = vunpack.c.l.b16 %v186
        %v322 = vunpack.c.l.b16 %v187
        %v323 = vunpack.c.l.b16 %v188
        %v324 = vunpack.c.l.b16 %v189
        %v325 = vunpack.c.l.b16 %v190
        %v326 = vunpack.c.l.b16 %v191
        %v327 = vunpack.c.l.b16 %v192
        %v328 = vunpack.c.l.b16 %v193
        %v329 = vunpack.c.l.b16 %v194
        %v330 = vunpack.c.l.b16 %v195
        %v331 = vunpack.c.l.b16 %v196
        %v332 = vunpack.c.l.b16 %v197
        %v333 = vunpack.c.l.b16 %v198
        %v334 = vunpack.c.l.b16 %v199
        %v335 = vunpack.c.l.b16 %v200
        %v336 = vunpack.c.l.b16 %v201
        %v337 = vpack.c.b16 %v322, %v321
        %v338 = vpack.c.b16 %v324, %v323
        %v339 = vpack.c.b16 %v326, %v325
        %v340 = vpack.c.b16 %v328, %v327
        %v341 = vpack.c.b16 %v330, %v329
        %v342 = vpack.c.b16 %v332, %v331
        %v343 = vpack.c.b16 %v334, %v333
        %v344 = vpack.c.b16 %v336, %v335
        %353 = vmatprep.subr.bf16.mxu0 0
        %354 = vmatpush1.bf16.msra.mxu0 %v337
        %355 = vmatprep.subr.bf16.mxu0 0
        %356 = vmatpush1.bf16.msra.mxu0 %v338
        %357 = vmatprep.subr.bf16.mxu0 0
        %358 = vmatpush1.bf16.msra.mxu0 %v339
        %359 = vmatprep.subr.bf16.mxu0 0
        %360 = vmatpush1.bf16.msra.mxu0 %v340
        %361 = vmatprep.subr.bf16.mxu0 0
        %362 = vmatpush1.bf16.msra.mxu0 %v341
        %363 = vmatprep.subr.bf16.mxu0 0
        %364 = vmatpush1.bf16.msra.mxu0 %v342
        %365 = vmatprep.subr.bf16.mxu0 0
        %366 = vmatpush1.bf16.msra.mxu0 %v343
        %367 = vmatprep.subr.bf16.mxu0 0
        %368 = vmatpush1.bf16.msra.mxu0 %v344
        %369 = vmatprep.subr.bf16.mxu0 0
        %370 = vmatpush1.bf16.msra.mxu0 0
        %371 = vmatprep.subr.bf16.mxu0 0
        %372 = vmatpush1.bf16.msra.mxu0 0
        %373 = vmatprep.subr.bf16.mxu0 0
        %374 = vmatpush1.bf16.msra.mxu0 0
        %375 = vmatprep.subr.bf16.mxu0 0
        %376 = vmatpush1.bf16.msra.mxu0 0
        %377 = vmatprep.subr.bf16.mxu0 0
        %378 = vmatpush1.bf16.msra.mxu0 0
        %379 = vmatprep.subr.bf16.mxu0 0
        %380 = vmatpush1.bf16.msra.mxu0 0
        %381 = vmatprep.subr.bf16.mxu0 0
        %382 = vmatpush1.bf16.msra.mxu0 0
        %383 = vmatprep.subr.bf16.mxu0 0
        %384 = vmatpush1.bf16.msra.mxu0 0
        %385 = vmatprep.mubr.bf16.mxu0 0
        %386 = vmatmul.mubr.bf16.gmra.mrb[0].mxu0 %v304
        %v387 = vpop.f32.mrb[0].mxu0
        %v388 = vadd.f32 0.0, %v387
        %v389 = vpop.f32.mrb[0].mxu0
        %v390 = vpop.f32.mrb[0].mxu0
        %v391 = vpop.f32.mrb[0].mxu0
        %392 = vdwg.mxu0
        %v393 = vrot.slane %v388, 4
        %v394 = vadd.f32 %v388, %v393
        %v395 = vrot.slane %v394, 2
        %v396 = vadd.f32 %v394, %v395
        %v397 = vrot.slane %v396, 1
        %v398 = vadd.f32 %v396, %v397
        %v399 = vmul.f32 %v388, %v388
        %v400 = vrot.slane %v399, 4
        %v401 = vadd.f32 %v399, %v400
        %v402 = vrot.slane %v401, 2
        %v403 = vadd.f32 %v401, %v402
        %v404 = vrot.slane %v403, 1
        %v405 = vadd.f32 %v403, %v404
        %v406 = vmul.f32 %v398, 0.125
        %v407 = vmul.f32 %v405, 0.125
        %v408 = vmul.f32 %v406, %v406
        %v409 = vsub.f32 %v407, %v408
        %v410 = vadd.f32 %v409, 1e-05
        %v411 = vrsqrt.pop %v410
        %v412 = vmul.f32 %v182, %v411
        %v413 = vmul.f32 %v406, %v412
        %v415 = vrot.slane %v413, 7
        %v417 = vsub.f32 %v182, %v415
        %v418 = vlaneseq
        %v419 = vshrl.u32 %v418, 7
        %v420 = vsub.s32 2, %v419
        %v421 = vrot.slane %v412, %v420
        %v422 = vmul.f32 %v388, %v421
        %v423 = vlaneseq
        %v424 = vshrl.u32 %v423, 7
        %v425 = vsub.s32 3, %v424
        %v426 = vrot.slane %v417, %v425
        %v427 = vadd.f32 %v422, %v426
        %v428 = vmax.f32 %v427, 0.0
        %v429 = vpack.c.bf16 %v428, %v428
        %v446 = vunpack.c.l.b16 %v202
        %v447 = vunpack.c.l.b16 %v203
        %v448 = vunpack.c.l.b16 %v204
        %v449 = vunpack.c.l.b16 %v205
        %v450 = vunpack.c.l.b16 %v206
        %v451 = vunpack.c.l.b16 %v207
        %v452 = vunpack.c.l.b16 %v208
        %v453 = vunpack.c.l.b16 %v209
        %v454 = vunpack.c.l.b16 %v210
        %v455 = vunpack.c.l.b16 %v211
        %v456 = vunpack.c.l.b16 %v212
        %v457 = vunpack.c.l.b16 %v213
        %v458 = vunpack.c.l.b16 %v214
        %v459 = vunpack.c.l.b16 %v215
        %v460 = vunpack.c.l.b16 %v216
        %v461 = vunpack.c.l.b16 %v217
        %v462 = vpack.c.b16 %v447, %v446
        %v463 = vpack.c.b16 %v449, %v448
        %v464 = vpack.c.b16 %v451, %v450
        %v465 = vpack.c.b16 %v453, %v452
        %v466 = vpack.c.b16 %v455, %v454
        %v467 = vpack.c.b16 %v457, %v456
        %v468 = vpack.c.b16 %v459, %v458
        %v469 = vpack.c.b16 %v461, %v460
        %478 = vmatprep.subr.bf16.mxu0 0
        %479 = vmatpush1.bf16.msra.mxu0 %v462
        %480 = vmatprep.subr.bf16.mxu0 0
        %481 = vmatpush1.bf16.msra.mxu0 %v463
        %482 = vmatprep.subr.bf16.mxu0 0
        %483 = vmatpush1.bf16.msra.mxu0 %v464
        %484 = vmatprep.subr.bf16.mxu0 0
        %485 = vmatpush1.bf16.msra.mxu0 %v465
        %486 = vmatprep.subr.bf16.mxu0 0
        %487 = vmatpush1.bf16.msra.mxu0 %v466
        %488 = vmatprep.subr.bf16.mxu0 0
        %489 = vmatpush1.bf16.msra.mxu0 %v467
        %490 = vmatprep.subr.bf16.mxu0 0
        %491 = vmatpush1.bf16.msra.mxu0 %v468
        %492 = vmatprep.subr.bf16.mxu0 0
        %493 = vmatpush1.bf16.msra.mxu0 %v469
        %494 = vmatprep.subr.bf16.mxu0 0
        %495 = vmatpush1.bf16.msra.mxu0 0
        %496 = vmatprep.subr.bf16.mxu0 0
        %497 = vmatpush1.bf16.msra.mxu0 0
        %498 = vmatprep.subr.bf16.mxu0 0
        %499 = vmatpush1.bf16.msra.mxu0 0
        %500 = vmatprep.subr.bf16.mxu0 0
        %501 = vmatpush1.bf16.msra.mxu0 0
        %502 = vmatprep.subr.bf16.mxu0 0
        %503 = vmatpush1.bf16.msra.mxu0 0
        %504 = vmatprep.subr.bf16.mxu0 0
        %505 = vmatpush1.bf16.msra.mxu0 0
        %506 = vmatprep.subr.bf16.mxu0 0
        %507 = vmatpush1.bf16.msra.mxu0 0
        %508 = vmatprep.subr.bf16.mxu0 0
        %509 = vmatpush1.bf16.msra.mxu0 0
        %510 = vmatprep.mubr.bf16.mxu0 0
        %511 = vmatmul.mubr.bf16.gmra.mrb[0].mxu0 %v429
        %v512 = vpop.f32.mrb[0].mxu0
        %v513 = vadd.f32 0.0, %v512
        %v514 = vpop.f32.mrb[0].mxu0
        %v515 = vpop.f32.mrb[0].mxu0
        %v516 = vpop.f32.mrb[0].mxu0
        %517 = vdwg.mxu0
        %v518 = vrot.slane %v513, 4
        %v519 = vadd.f32 %v513, %v518
        %v520 = vrot.slane %v519, 2
        %v521 = vadd.f32 %v519, %v520
        %v522 = vrot.slane %v521, 1
        %v523 = vadd.f32 %v521, %v522
        %v524 = vmul.f32 %v513, %v513
        %v525 = vrot.slane %v524, 4
        %v526 = vadd.f32 %v524, %v525
        %v527 = vrot.slane %v526, 2
        %v528 = vadd.f32 %v526, %v527
        %v529 = vrot.slane %v528, 1
        %v530 = vadd.f32 %v528, %v529
        %v531 = vmul.f32 %v523, 0.125
        %v532 = vmul.f32 %v530, 0.125
        %v533 = vmul.f32 %v531, %v531
        %v534 = vsub.f32 %v532, %v533
        %v535 = vadd.f32 %v534, 1e-05
        %v536 = vrsqrt.pop %v535
        %v537 = vmul.f32 %v182, %v536
        %v538 = vmul.f32 %v531, %v537
        %v540 = vrot.slane %v538, 7
        %v542 = vsub.f32 %v182, %v540
        %v543 = vlaneseq
        %v544 = vshrl.u32 %v543, 7
        %v545 = vsub.s32 4, %v544
        %v546 = vrot.slane %v537, %v545
        %v547 = vmul.f32 %v513, %v546
        %v548 = vlaneseq
        %v549 = vshrl.u32 %v548, 7
        %v550 = vsub.s32 5, %v549
        %v551 = vrot.slane %v542, %v550
        %v552 = vadd.f32 %v547, %v551
        %v553 = vmax.f32 %v552, 0.0
        %v554 = vlaneseq
        %v555 = vshrl.u32 %v554, 7
        %v556 = vsub.s32 6, %v555
        %v557 = vrot.slane %v182, %v556
        %v558 = vmul.f32 %v553, %v557
        %v559 = vlaneseq
        %v560 = vshrl.u32 %v559, 7
        %v561 = vsub.s32 7, %v560
        %v562 = vrot.slane %v182, %v561
        %v563 = vadd.f32 %v558, %v562
        %564 = vst [vmem:[%s176] sm:$0xff] %v563
        %s565 = sand.u32 %s94, 1
        %s566 = scalar_lea.sflag [#allocation4], %s565
        %s567 = sand.u32 %s94, 1
        %s568 = smul.addr %s567, 8
        %s569 = scalar_lea.vmem [#allocation5], %s568
        // Predicated region
        $region37: #{dqn_forward.1} parent=31 // pred_check
          %p570 = pneg %p104
        $region38: #{dqn_forward.1} parent=31 // pred_check_branch
          %572 = sbr.rel (%p570) target = $region40
        $region39: #{dqn_forward.1} parent=31 // pred_region
          %s574 = ssub.s32 128, 128
          %575 = vsyncadd %s566, %s574
          %s576 = smul.addr %s18, 128
          %s577 = scalar_lea.hbm %s3, %s576
          %s579 = sshll.u32 %s569, 4
          %s580 = int_to_ptr.vmem [resolvable:$true] %s579
          %582 = dma.vmem_to_hbm [thread:$0]  %s580, 128, %s577, %s566
        $region40: #{dqn_forward.1} parent=31 // pred_fallthru
          _
      $region32: #{dqn_forward.1} parent=5 // pred_fallthru
        _
      %p583 = scmp.le.s32.totalorder 2, %s13
      // Predicated region
      $region41: #{dqn_forward.1} parent=5 // pred_check
        %p584 = pneg %p583
      $region42: #{dqn_forward.1} parent=5 // pred_check_branch
        %586 = sbr.rel (%p584) target = $region44
      $region43: #{dqn_forward.1} parent=5 // pred_region
        %s587 = ssub.s32 %s13, 2
        // Predicated region
        $region45: #{dqn_forward.1} parent=43 // pred_check
          %p588 = pneg %p110
        $region46: #{dqn_forward.1} parent=43 // pred_check_branch
          %590 = sbr.rel (%p588) target = $region48
        $region47: #{dqn_forward.1} parent=43 // pred_region
          %s591 = sand.u32 %s95, 1
          %s592 = scalar_lea.sflag [#allocation4], %s591
          %s593 = sand.u32 %s95, 1
          %s594 = smul.addr %s593, 8
          %s595 = scalar_lea.vmem [#allocation5], %s594
          %596 = dma.done %s592, 128
        $region48: #{dqn_forward.1} parent=43 // pred_fallthru
          _
      $region44: #{dqn_forward.1} parent=5 // pred_fallthru
        _
    $region6: #{dqn_forward.1} parent=1 // loop_footer
      %s17 = sadd.s32 1, %s13
    $region7: #{dqn_forward.1} parent=1 // loop_footer_branch
      %12 = sbr.rel target = $region3
    $region8: #{dqn_forward.1} parent=1 // loop_exit
      _
    %597 = vsyncpa [#allocation3], 1
    %s598 = scalar_lea.sflag [#allocation3], 1
    %599 = vsyncpa %s598, 1
    %600 = vsyncpa [#allocation4], 1
    %s601 = scalar_lea.sflag [#allocation4], 1
    %602 = vsyncpa %s601, 1

</llo_original>
